<compile_context>
chip_gen: v7x
topology: tpu7x:2x2x1
jax: 0.10.0
libtpu: 0.0.40
codegen_flags: <defaults>
</compile_context>

<pallas_src>
import jax
import jax.numpy as jnp
from jax.experimental import pallas as pl
from jax.experimental.pallas import tpu as pltpu

_LANE = 128
_MAIN_BLOCK_BYTES = 4 * 1024 * 1024    # per-array block target on the aligned path
_RAGGED_BLOCK_BYTES = 512 * 1024       # conservative: (1, N) layout may pad sublanes
_VMEM_LIMIT_BYTES = 32 * 1024 * 1024   # raises v5e's 16 MiB default; == v6e/v7x default


def _sublane_multiple(dtype):
    """Packed sublane granularity: f32 -> 8, bf16/f16 -> 16, int8/fp8 -> 32."""
    return max(8, 32 // jnp.dtype(dtype).itemsize)


def _mish_f32(xf):
    """Mish on f32 with a single transcendental (exp).

    tanh(softplus(x)) = (t^2 + 2t) / (t^2 + 2t + 2) with t = exp(x).
    x is clamped before exp so t^2 never overflows f32; for x > 20,
    tanh(softplus(x)) == 1.0 exactly at f32 precision, so the guard is exact.
    """
    t = jnp.exp(jnp.minimum(xf, 20.0))
    num = t * (t + 2.0)
    tsp = num / (num + 2.0)          # exact divide (approx recip may break 1e-5 rtol)
    tsp = jnp.where(xf > 20.0, 1.0, tsp)
    return xf * tsp


def _mish_kernel(x_ref, o_ref):
    xf = x_ref[...].astype(jnp.float32)
    o_ref[...] = _mish_f32(xf).astype(o_ref.dtype)


def _compiler_params():
    # "parallel" lets the single grid axis be sharded across TensorCores on
    # multi-TC chips (v7x).  If profiling on v7x shows only one TC driving the
    # DMA stream, switch this axis to pltpu.CORE_PARALLEL (no effect on v5e/v6e).
    return pltpu.CompilerParams(
        dimension_semantics=("parallel",),
        vmem_limit_bytes=_VMEM_LIMIT_BYTES,
    )


def _cost(n_elems, dtype):
    itemsize = jnp.dtype(dtype).itemsize
    return pl.CostEstimate(
        flops=7 * n_elems,
        transcendentals=n_elems,
        bytes_accessed=2 * itemsize * n_elems,
    )


def _run_aligned(x2d, tile_rows, donate):
    """Streaming (rows, 128) path for element counts divisible by 128."""
    rows = x2d.shape[0]
    dtype = x2d.dtype
    itemsize = jnp.dtype(dtype).itemsize
    sub = _sublane_multiple(dtype)

    if tile_rows is None:
        # ~4 MiB per block per array -> 16 MiB in flight with double buffering.
        tile_rows = max(sub, _MAIN_BLOCK_BYTES // (_LANE * itemsize))

    tr = min(tile_rows, rows)
    # Block shape must be (multiple of packed sublanes, 128) OR equal full dims.
    if tr != rows and tr % sub != 0:
        tr = max(sub, (tr // sub) * sub)
    grid = (pl.cdiv(rows, tr),)

    extra = {"input_output_aliases": {0: 0}} if donate else {}
    return pl.pallas_call(
        _mish_kernel,
        out_shape=jax.ShapeDtypeStruct((rows, _LANE), dtype),
        grid_spec=pltpu.PrefetchScalarGridSpec(
            num_scalar_prefetch=0,
            grid=grid,
            in_specs=[pl.BlockSpec((tr, _LANE), lambda i: (i, 0))],
            out_specs=pl.BlockSpec((tr, _LANE), lambda i: (i, 0)),
        ),
        compiler_params=_compiler_params(),
        cost_estimate=_cost(rows * _LANE, dtype),
        **extra,
    )(x2d)


def _run_ragged(x_flat, donate):
    """Single-pass (1, n) path for element counts NOT divisible by 128.

    One HBM read + one HBM write; no pad, no concatenate.  If n fits in one
    conservative block, the block equals the full array (no alignment
    constraint, no partial blocks); otherwise blocks are (1, T) with T a
    multiple of 128 and the last block is boundary-masked by Pallas.
    """
    n = x_flat.shape[0]
    dtype = x_flat.dtype
    itemsize = jnp.dtype(dtype).itemsize

    block_elems = max(_LANE, (_RAGGED_BLOCK_BYTES // itemsize // _LANE) * _LANE)
    bc = n if n <= block_elems else block_elems
    grid = (pl.cdiv(n, bc),)

    extra = {"input_output_aliases": {0: 0}} if donate else {}
    out = pl.pallas_call(
        _mish_kernel,
        out_shape=jax.ShapeDtypeStruct((1, n), dtype),
        grid_spec=pltpu.PrefetchScalarGridSpec(
            num_scalar_prefetch=0,
            grid=grid,
            in_specs=[pl.BlockSpec((1, bc), lambda i: (0, i))],
            out_specs=pl.BlockSpec((1, bc), lambda i: (0, i)),
        ),
        compiler_params=_compiler_params(),
        cost_estimate=_cost(n, dtype),
        **extra,
    )(x_flat.reshape(1, n))
    return out.reshape(-1)


def mish_pallas(x, *, tile_rows=None, donate_input=False):
    """Elementwise Mish. Accepts any shape; computes in f32, returns input dtype."""
    orig_shape = x.shape
    n = x.size
    if n == 0:
        return x

    x_flat = jnp.ravel(x)
    if n % _LANE == 0:
        # Common case (e.g. NCHW conv activations): free reshape, no pad/slice.
        out2d = _run_aligned(x_flat.reshape(n // _LANE, _LANE), tile_rows, donate_input)
        return out2d.reshape(orig_shape)

    # Ragged case: single-pass kernel over a (1, n) view (no concat round trip).
    return _run_ragged(x_flat, donate_input).reshape(orig_shape)


def mish_ref(x):
    # Reference uses the classic numerically-stable softplus + tanh form.
    xf = x.astype(jnp.float32)
    sp = jnp.maximum(xf, 0.0) + jnp.log1p(jnp.exp(-jnp.abs(xf)))
    return (xf * jnp.tanh(sp)).astype(x.dtype)


if __name__ == "__main__":
    key = jax.random.PRNGKey(0)

    # NCHW input, like PyTorch conv activations: batch=2, channels=4, 16x16 spatial.
    x = jax.random.normal(key, (2, 4, 16, 16), dtype=jnp.float32) * 3.0
    y = mish_pallas(x)
    jax.block_until_ready(y)
    y_ref = mish_ref(x)
    assert y.shape == x.shape and y.dtype == x.dtype
    assert jnp.allclose(y, y_ref, atol=1e-5, rtol=1e-5), "f32 mismatch vs reference"

    # Non-128-divisible element count -> single-pass ragged (1, n) kernel path.
    x2 = jax.random.normal(jax.random.PRNGKey(1), (3, 7, 13), dtype=jnp.float32) * 3.0
    y2 = mish_pallas(x2)
    jax.block_until_ready(y2)
    assert y2.shape == x2.shape and y2.dtype == x2.dtype
    assert jnp.allclose(y2, mish_ref(x2), atol=1e-5, rtol=1e-5), "ragged mismatch"

    # bf16 activations (exercises per-dtype handling; compute still in f32).
    x3 = (jax.random.normal(jax.random.PRNGKey(2), (2, 4, 16, 16), dtype=jnp.float32)
          * 3.0).astype(jnp.bfloat16)
    y3 = mish_pallas(x3)
    jax.block_until_ready(y3)
    assert y3.dtype == jnp.bfloat16
    assert jnp.allclose(y3.astype(jnp.float32), mish_ref(x3).astype(jnp.float32),
                        atol=2e-2, rtol=2e-2), "bf16 mismatch"

    print("KERNEL_OK")
</pallas_src>

<mosaic_0001>
module attributes {stable_mosaic.version = 11 : i64} {
  func.func @_mish_kernel(%arg0: i32, %arg1: memref<16x128xf32, #tpu.memory_space<vmem>>, %arg2: memref<16x128xf32, #tpu.memory_space<vmem>>) attributes {dimension_semantics = [#tpu.dimension_semantics<parallel>], iteration_bounds = array<i64: 1>, scalar_prefetch = 0 : i64, scratch_operands = 0 : i64, tpu.core_type = #tpu.core_type<tc>, window_params = [{transform_indices = @transform_0, window_bounds = array<i64: 16, 128>}, {transform_indices = @transform_1, window_bounds = array<i64: 16, 128>}]} {
    %c0 = arith.constant 0 : index
    %c0_0 = arith.constant 0 : index
    %0 = vector.load %arg1[%c0, %c0_0] : memref<16x128xf32, #tpu.memory_space<vmem>>, vector<16x128xf32>
    %cst = arith.constant 2.000000e+01 : f32
    %1 = vector.broadcast %cst : f32 to vector<16x128xf32>
    %2 = arith.minimumf %0, %1 : vector<16x128xf32>
    %3 = math.exp %2 : vector<16x128xf32>
    %cst_1 = arith.constant 2.000000e+00 : f32
    %4 = vector.broadcast %cst_1 : f32 to vector<16x128xf32>
    %5 = arith.addf %3, %4 : vector<16x128xf32>
    %6 = arith.mulf %3, %5 : vector<16x128xf32>
    %cst_2 = arith.constant 2.000000e+00 : f32
    %7 = vector.broadcast %cst_2 : f32 to vector<16x128xf32>
    %8 = arith.addf %6, %7 : vector<16x128xf32>
    %9 = arith.divf %6, %8 : vector<16x128xf32>
    %cst_3 = arith.constant 2.000000e+01 : f32
    %10 = vector.broadcast %cst_3 : f32 to vector<16x128xf32>
    %11 = arith.cmpf ogt, %0, %10 : vector<16x128xf32>
    %cst_4 = arith.constant 1.000000e+00 : f32
    %12 = vector.broadcast %cst_4 : f32 to vector<16x128xf32>
    %13 = arith.select %11, %12, %9 : vector<16x128xi1>, vector<16x128xf32>
    %14 = arith.mulf %0, %13 : vector<16x128xf32>
    %c0_5 = arith.constant 0 : index
    %c0_6 = arith.constant 0 : index
    %15 = vector.load %arg2[%c0_5, %c0_6] : memref<16x128xf32, #tpu.memory_space<vmem>>, vector<16x128xf32>
    tpu.vector_store %arg2[%c0_5, %c0_6], %14 {strides = array<i32>} : memref<16x128xf32, #tpu.memory_space<vmem>>, vector<16x128xf32>,
    return
  }
  func.func @transform_0(%arg0: i32) -> (i32, i32) {
    %c0_i32 = arith.constant 0 : i32
    %c0_i32_0 = arith.constant 0 : i32
    return %arg0, %c0_i32 : i32, i32
  }
  func.func @transform_1(%arg0: i32) -> (i32, i32) {
    %c0_i32 = arith.constant 0 : i32
    %c0_i32_0 = arith.constant 0 : i32
    return %arg0, %c0_i32 : i32, i32
  }
}

</mosaic_0001>

<llo_original>
// kernel: tpu_custom_call.1
$region0: #{tpu_custom_call.1}
  #allocation0 [shape = 'u32[]', space=smem, size = 0x4, offset = 0x4, fixed_abs, tag = 'smem constant byte address 0x4 - core index']
  #allocation1 [shape = 'u32[144,128]{1,0:T(1,128)}', space=vmem, size = 0x12000, scoped, tag = 'internal scratch']
  %s0 = inlined_call_operand.hbm [shape: f32[16,128], index: 0, kind: input, shape index: {}]
  %s1 = inlined_call_operand.hbm [shape: f32[16,128], index: 1, kind: output, shape index: {}]
  %s2 = sld [smem:[#allocation0]]
  $region18: #{tpu_custom_call.1} parent=0
    _
  %s4 = ssub.s32 1, %s2
  %s5 = scalar_select 0, %s4, %s2
  $region1: #{tpu_custom_call.1} parent=0
    #allocation2 [shape = 'u8[8192]{0}', space=vmem, size = 0x2000, scoped, tag = 'input window, operand 0, single buffered']
    #allocation3 [shape = 's32[1]{0}', space=sflag, size = 0x4, scoped, tag = 'scoped memory for tpu_custom_call.1']
    #allocation4 [shape = 's32[1]{0}', space=sflag, size = 0x4, scoped, tag = 'scoped memory for tpu_custom_call.1']
    #allocation5 [shape = 'u8[8192]{0}', space=vmem, size = 0x2000, scoped, tag = 'output window, operand 0, single buffered']
    %6 = vsyncpa [#allocation3], 0
    %7 = vsyncpa [#allocation4], 0
    // Predicated region
    $region2: #{tpu_custom_call.1} parent=1 // pred_check
      _
    $region3: #{tpu_custom_call.1} parent=1 // pred_check_branch
      %9 = sbr.rel (0) target = $region5
    $region4: #{tpu_custom_call.1} parent=1 // pred_region
      %s11 = ssub.s32 256, 256
      %12 = vsyncadd [#allocation3], %s11
      %s13 = sshll.u32 [#allocation2], 4
      %s14 = int_to_ptr.vmem [resolvable:$true] %s13
      %19 = dma.hbm_to_vmem [thread:$0]  %s0, 256, %s14, [#allocation3], 128, 128, 8
    $region5: #{tpu_custom_call.1} parent=1 // pred_fallthru
      _
    // Predicated region
    $region6: #{tpu_custom_call.1} parent=1 // pred_check
      _
    $region7: #{tpu_custom_call.1} parent=1 // pred_check_branch
      %21 = sbr.rel (0) target = $region9
    $region8: #{tpu_custom_call.1} parent=1 // pred_region
      %22 = dma.done [#allocation3], 256
    $region9: #{tpu_custom_call.1} parent=1 // pred_fallthru
      _
    %v23 = vld [vmem:[#allocation2] sm:$0xff]
    %v24 = vld [vmem:[#allocation2 + $0x8] sm:$0xff]
    %v25 = vmin.f32 %v23, 20.0
    %v26 = vmin.f32 %v24, 20.0
    %v27 = vmul.f32 %v25, 1.442695
    %v28 = vpow.pop %v27
    %v29 = vmul.f32 %v26, 1.442695
    %v30 = vpow.pop %v29
    %v31 = vadd.f32 %v28, 2.0
    %v32 = vadd.f32 %v30, 2.0
    %v33 = vmul.f32 %v28, %v31
    %v34 = vmul.f32 %v30, %v32
    %v35 = vadd.f32 %v33, 2.0
    %v36 = vadd.f32 %v34, 2.0
    %v37 = vrcp.pop %v35
    %v38 = vmul.f32 %v33, %v37
    %v39 = vrcp.pop %v36
    %v40 = vmul.f32 %v34, %v39
    %vm41 = vcmp.gt.f32.partialorder %v23, 20.0
    %vm42 = vcmp.gt.f32.partialorder %v24, 20.0
    %v43 = vsel %vm41, 1.0, %v38
    %v44 = vsel %vm42, 1.0, %v40
    %v45 = vmul.f32 %v23, %v43
    %v46 = vmul.f32 %v24, %v44
    %47 = vst [vmem:[#allocation5] sm:$0xff] %v45
    %48 = vst [vmem:[#allocation5 + $0x8] sm:$0xff] %v46
    // Predicated region
    $region10: #{tpu_custom_call.1} parent=1 // pred_check
      _
    $region11: #{tpu_custom_call.1} parent=1 // pred_check_branch
      %50 = sbr.rel (0) target = $region13
    $region12: #{tpu_custom_call.1} parent=1 // pred_region
      %s52 = ssub.s32 256, 256
      %53 = vsyncadd [#allocation4], %s52
      %s54 = sshll.u32 [#allocation5], 4
      %s55 = int_to_ptr.vmem [resolvable:$true] %s54
      %60 = dma.vmem_to_hbm [thread:$0]  %s55, 256, %s1, [#allocation4], 128, 128, 8
    $region13: #{tpu_custom_call.1} parent=1 // pred_fallthru
      _
    // Predicated region
    $region14: #{tpu_custom_call.1} parent=1 // pred_check
      _
    $region15: #{tpu_custom_call.1} parent=1 // pred_check_branch
      %62 = sbr.rel (0) target = $region17
    $region16: #{tpu_custom_call.1} parent=1 // pred_region
      %63 = dma.done [#allocation4], 256
    $region17: #{tpu_custom_call.1} parent=1 // pred_fallthru
      _
    %64 = vsyncpa [#allocation3], 1
    %65 = vsyncpa [#allocation4], 1

</llo_original>
